<compile_context>
chip_gen: v5e
topology: v5e:2x2
jax: 0.10.0
libtpu: 0.0.40
codegen_flags: <defaults>
</compile_context>

<pallas_src>
import jax
import jax.numpy as jnp
from jax.experimental import pallas as pl
from jax.experimental.pallas import tpu as pltpu

_LANE = 128      # f32 lane width; narrow last dims pad to this in VMEM
_SUBLANE = 8     # f32 sublane tile


def _round_up(n, m):
    return ((n + m - 1) // m) * m


def _vmem_capacity_bytes():
    """Physical VMEM of the attached TPU (conservative fallback if unknown)."""
    try:
        return int(pltpu.get_tpu_info().vmem_capacity_bytes)
    except Exception:
        return 64 << 20          # v7x per-TensorCore VMEM (smallest current gen)


def _choose_batch_tile(B, block_b, vmem_bytes):
    """Pick the batch tile TB (multiple of 8).

    - Hardware cap: the double-buffered lane-padded (TB,9)+(TB,1) f32 blocks cost
      ~TB*2 KiB; cap TB at 8192 (~17 MiB) on 64 MiB-VMEM parts (v7x) so there is
      headroom, and let 128 MiB parts (v5e/v6e) use block_b as passed
      (default 8192; callers may raise to 16384-32768 there).
    - Megacore/pipelining: aim for >= 4 grid steps when the batch allows it, so
      v7x's two TensorCores each get >= 2 steps and DMA stays double-buffered.
    """
    cap = block_b
    if vmem_bytes <= (64 << 20):
        cap = min(cap, 8192)
    cap = max(_SUBLANE, (cap // _SUBLANE) * _SUBLANE)
    if B >= 4 * _SUBLANE:
        target = _round_up(-(-B // 4), _SUBLANE)      # cdiv(B, 4), sublane-aligned
    else:
        target = _round_up(B, _SUBLANE)
    return min(cap, target)


def _mlp_kernel(x_ref, w1_ref, b1_ref, w2_ref, b2_ref, o_ref):
    # x_ref : (TB, 9)   w1_ref : (9, 9) (in, out)   b1_ref : (1, 9)
    # w2_ref: (1, 9) (PyTorch row layout)           b2_ref : (1, 1)   o_ref : (TB, 1)
    x = x_ref[...].astype(jnp.float32)              # cast in-kernel; DMA at source width
    h = jnp.dot(x, w1_ref[...], preferred_element_type=jnp.float32) + b1_ref[...]
    h = jnp.maximum(h, 0.0)                         # ReLU (VPU)
    # Layer 2 (out_features=1): VPU multiply + lane reduction (XLU) instead of a
    # second, 1-wide MXU pass.
    y = jnp.sum(h * w2_ref[...], axis=-1, keepdims=True) + b2_ref[...]
    o_ref[...] = y.astype(o_ref.dtype)


def prepare_params(w1, b1, w2, b2):
    """One-time (per parameter update) massaging of PyTorch-layout params.

    Hoisted out of the forward so a training loop does not re-emit these tiny
    transpose/reshape/cast ops every TD step.
    """
    w1_t = jnp.asarray(w1, jnp.float32).T               # (in, out) = (9, 9)
    b1_r = jnp.asarray(b1, jnp.float32).reshape(1, 9)
    w2_r = jnp.asarray(w2, jnp.float32).reshape(1, 9)   # row layout for VPU layer 2
    b2_r = jnp.asarray(b2, jnp.float32).reshape(1, 1)
    return w1_t, b1_r, w2_r, b2_r


def value_function_forward(x, prepared, *, block_b=8192):
    """Pallas forward pass.

    x        : any shape whose trailing dims flatten to 9 (e.g. (B,3,3) or (B,9));
               any numeric dtype (kept at source width for the HBM->VMEM DMA).
    prepared : output of prepare_params(w1, b1, w2, b2).
    returns  : (B, 1) float32
    """
    w1_t, b1_r, w2_r, b2_r = prepared
    x_flat = jnp.reshape(x, (-1, 9))                 # x.view(-1, 9); keep source dtype
    B = x_flat.shape[0]

    vmem_bytes = _vmem_capacity_bytes()
    TB = _choose_batch_tile(B, block_b, vmem_bytes)
    B_pad = _round_up(B, TB)
    if B_pad != B:
        x_flat = jnp.pad(x_flat, ((0, B_pad - B), (0, 0)))
    grid = (B_pad // TB,)

    # Explicit VMEM budget: the (TB, 9) input and (TB, 1) output blocks each pad
    # to TB*128 lanes and are double-buffered; weights are tiny.  Clamp to the
    # chip's physical VMEM so the request is always honourable.
    in_itemsize = jnp.dtype(x_flat.dtype).itemsize
    blk_in_bytes = TB * _LANE * in_itemsize
    blk_out_bytes = TB * _LANE * 4
    vmem_limit = 2 * (blk_in_bytes + blk_out_bytes) + (2 << 20)
    vmem_limit = max(vmem_limit, 4 << 20)
    vmem_limit = min(vmem_limit, int(vmem_bytes * 0.9))

    # Advisory cost so XLA overlaps neighbouring ops around the custom call.
    params_bytes = (9 * 9 + 9 + 9 + 1) * 4
    cost = pl.CostEstimate(
        flops=2 * B_pad * (9 * 9 + 9),
        transcendentals=0,
        bytes_accessed=int(B_pad * 9 * in_itemsize + B_pad * 4 + params_bytes),
    )

    out = pl.pallas_call(
        _mlp_kernel,
        out_shape=jax.ShapeDtypeStruct((B_pad, 1), jnp.float32),
        grid_spec=pltpu.PrefetchScalarGridSpec(
            num_scalar_prefetch=0,
            grid=grid,
            in_specs=[
                pl.BlockSpec((TB, 9), lambda i: (i, 0)),   # batch-tiled input
                pl.BlockSpec((9, 9), lambda i: (0, 0)),    # VMEM-resident weights
                pl.BlockSpec((1, 9), lambda i: (0, 0)),
                pl.BlockSpec((1, 9), lambda i: (0, 0)),
                pl.BlockSpec((1, 1), lambda i: (0, 0)),
            ],
            out_specs=pl.BlockSpec((TB, 1), lambda i: (i, 0)),
        ),
        compiler_params=pltpu.CompilerParams(
            dimension_semantics=("parallel",),   # 2 TCs on v7x; grid >= 4 when B allows
            vmem_limit_bytes=int(vmem_limit),
        ),
        cost_estimate=cost,
    )(x_flat, w1_t, b1_r, w2_r, b2_r)
    return out[:B]


def value_function_approximator(x, w1, b1, w2, b2, *, block_b=8192):
    """PyTorch-signature convenience wrapper (re-prepares params every call)."""
    return value_function_forward(x, prepare_params(w1, b1, w2, b2), block_b=block_b)


def _reference(x, w1, b1, w2, b2):
    """Pure-JAX reference mirroring the PyTorch module."""
    x_flat = jnp.reshape(x, (-1, 9)).astype(jnp.float32)
    h = jnp.maximum(x_flat @ w1.T + b1, 0.0)
    return h @ w2.T + b2


if __name__ == "__main__":
    key = jax.random.PRNGKey(0)
    k_x, k_w1, k_b1, k_w2, k_b2, k_x2, k_x3 = jax.random.split(key, 7)

    # Deterministic parameter init (PyTorch Linear shapes: W=(out,in), b=(out,)).
    bound1 = 1.0 / jnp.sqrt(9.0)
    w1 = jax.random.uniform(k_w1, (9, 9), minval=-bound1, maxval=bound1, dtype=jnp.float32)
    b1 = jax.random.uniform(k_b1, (9,), minval=-bound1, maxval=bound1, dtype=jnp.float32)
    w2 = jax.random.uniform(k_w2, (1, 9), minval=-bound1, maxval=bound1, dtype=jnp.float32)
    b2 = jax.random.uniform(k_b2, (1,), minval=-bound1, maxval=bound1, dtype=jnp.float32)
    prepared = prepare_params(w1, b1, w2, b2)

    # Case 1: tiny tic-tac-toe board batch (4, 3, 3) -> view(-1, 9) inside forward.
    x1 = jax.random.normal(k_x, (4, 3, 3), dtype=jnp.float32)
    out1 = jax.block_until_ready(value_function_approximator(x1, w1, b1, w2, b2))
    ref1 = _reference(x1, w1, b1, w2, b2)
    assert out1.shape == (4, 1), out1.shape
    assert jnp.allclose(out1, ref1, atol=1e-5, rtol=1e-5)

    # Case 2: non-multiple batch with a small tile (grid > 1 + padding path).
    x2 = jax.random.normal(k_x2, (530, 9), dtype=jnp.float32)
    out2 = jax.block_until_ready(value_function_forward(x2, prepared, block_b=128))
    ref2 = _reference(x2, w1, b1, w2, b2)
    assert out2.shape == (530, 1), out2.shape
    assert jnp.allclose(out2, ref2, atol=1e-5, rtol=1e-5)

    # Case 3: default tiling path (>= 4 grid steps, hoisted prepared params reused).
    x3 = jax.random.normal(k_x3, (2048, 9), dtype=jnp.float32)
    out3 = jax.block_until_ready(value_function_forward(x3, prepared))
    ref3 = _reference(x3, w1, b1, w2, b2)
    assert out3.shape == (2048, 1), out3.shape
    assert jnp.allclose(out3, ref3, atol=1e-5, rtol=1e-5)

    print("KERNEL_OK")
</pallas_src>

<mosaic_0001>
module attributes {stable_mosaic.version = 11 : i64} {
  func.func @_mlp_kernel(%arg0: i32, %arg1: memref<8x9xf32, #tpu.memory_space<vmem>>, %arg2: memref<9x9xf32, #tpu.memory_space<vmem>>, %arg3: memref<1x9xf32, #tpu.memory_space<vmem>>, %arg4: memref<1x9xf32, #tpu.memory_space<vmem>>, %arg5: memref<1x1xf32, #tpu.memory_space<vmem>>, %arg6: memref<8x1xf32, #tpu.memory_space<vmem>>) attributes {dimension_semantics = [#tpu.dimension_semantics<parallel>], iteration_bounds = array<i64: 1>, scalar_prefetch = 0 : i64, scratch_operands = 0 : i64, tpu.core_type = #tpu.core_type<tc>, window_params = [{transform_indices = @transform_0, window_bounds = array<i64: 8, 9>}, {pipeline_mode = #tpu.pipeline_mode<synchronous>, transform_indices = @transform_1, window_bounds = array<i64: 9, 9>}, {pipeline_mode = #tpu.pipeline_mode<synchronous>, transform_indices = @transform_2, window_bounds = array<i64: 1, 9>}, {pipeline_mode = #tpu.pipeline_mode<synchronous>, transform_indices = @transform_3, window_bounds = array<i64: 1, 9>}, {pipeline_mode = #tpu.pipeline_mode<synchronous>, transform_indices = @transform_4, window_bounds = array<i64: 1, 1>}, {transform_indices = @transform_5, window_bounds = array<i64: 8, 1>}]} {
    %c0 = arith.constant 0 : index
    %c0_0 = arith.constant 0 : index
    %0 = vector.load %arg1[%c0, %c0_0] : memref<8x9xf32, #tpu.memory_space<vmem>>, vector<8x9xf32>
    %c0_1 = arith.constant 0 : index
    %c0_2 = arith.constant 0 : index
    %1 = vector.load %arg2[%c0_1, %c0_2] : memref<9x9xf32, #tpu.memory_space<vmem>>, vector<9x9xf32>
    %cst = arith.constant dense<0.000000e+00> : vector<8x9xf32>
    %2 = tpu.matmul %0, %1, %cst {dimension_numbers = #tpu.dot_dimension_numbers<[1], [0], [0], [1], [0, 0, 1, 1], [], []>} : vector<8x9xf32>, vector<9x9xf32>, vector<8x9xf32> -> vector<8x9xf32>
    %c0_3 = arith.constant 0 : index
    %c0_4 = arith.constant 0 : index
    %3 = vector.load %arg3[%c0_3, %c0_4] : memref<1x9xf32, #tpu.memory_space<vmem>>, vector<1x9xf32>
    %4 = vector.broadcast %3 : vector<1x9xf32> to vector<8x9xf32>
    %5 = arith.addf %2, %4 : vector<8x9xf32>
    %cst_5 = arith.constant 0.000000e+00 : f32
    %6 = vector.broadcast %cst_5 : f32 to vector<8x9xf32>
    %7 = arith.maximumf %5, %6 : vector<8x9xf32>
    %c0_6 = arith.constant 0 : index
    %c0_7 = arith.constant 0 : index
    %8 = vector.load %arg4[%c0_6, %c0_7] : memref<1x9xf32, #tpu.memory_space<vmem>>, vector<1x9xf32>
    %9 = vector.broadcast %8 : vector<1x9xf32> to vector<8x9xf32>
    %10 = arith.mulf %7, %9 : vector<8x9xf32>
    %cst_8 = arith.constant dense<0.000000e+00> : vector<8xf32>
    %11 = vector.multi_reduction <add>, %10, %cst_8 [1] : vector<8x9xf32> to vector<8xf32>
    %12 = vector.shape_cast %11 : vector<8xf32> to vector<8x1xf32>
    %c0_9 = arith.constant 0 : index
    %c0_10 = arith.constant 0 : index
    %13 = vector.load %arg5[%c0_9, %c0_10] : memref<1x1xf32, #tpu.memory_space<vmem>>, vector<1x1xf32>
    %14 = vector.broadcast %13 : vector<1x1xf32> to vector<8x1xf32>
    %15 = arith.addf %12, %14 : vector<8x1xf32>
    %c0_11 = arith.constant 0 : index
    %c0_12 = arith.constant 0 : index
    %16 = vector.load %arg6[%c0_11, %c0_12] : memref<8x1xf32, #tpu.memory_space<vmem>>, vector<8x1xf32>
    tpu.vector_store %arg6[%c0_11, %c0_12], %15 {strides = array<i32>} : memref<8x1xf32, #tpu.memory_space<vmem>>, vector<8x1xf32>,
    return
  }
  func.func @transform_0(%arg0: i32) -> (i32, i32) {
    %c0_i32 = arith.constant 0 : i32
    %c0_i32_0 = arith.constant 0 : i32
    return %arg0, %c0_i32 : i32, i32
  }
  func.func @transform_1(%arg0: i32) -> (i32, i32) {
    %c0_i32 = arith.constant 0 : i32
    %c0_i32_0 = arith.constant 0 : i32
    %c0_i32_1 = arith.constant 0 : i32
    return %c0_i32, %c0_i32_0 : i32, i32
  }
  func.func @transform_2(%arg0: i32) -> (i32, i32) {
    %c0_i32 = arith.constant 0 : i32
    %c0_i32_0 = arith.constant 0 : i32
    %c0_i32_1 = arith.constant 0 : i32
    return %c0_i32, %c0_i32_0 : i32, i32
  }
  func.func @transform_3(%arg0: i32) -> (i32, i32) {
    %c0_i32 = arith.constant 0 : i32
    %c0_i32_0 = arith.constant 0 : i32
    %c0_i32_1 = arith.constant 0 : i32
    return %c0_i32, %c0_i32_0 : i32, i32
  }
  func.func @transform_4(%arg0: i32) -> (i32, i32) {
    %c0_i32 = arith.constant 0 : i32
    %c0_i32_0 = arith.constant 0 : i32
    %c0_i32_1 = arith.constant 0 : i32
    return %c0_i32, %c0_i32_0 : i32, i32
  }
  func.func @transform_5(%arg0: i32) -> (i32, i32) {
    %c0_i32 = arith.constant 0 : i32
    %c0_i32_0 = arith.constant 0 : i32
    return %arg0, %c0_i32 : i32, i32
  }
}

</mosaic_0001>

<llo_original>
// kernel: tpu_custom_call.1
$region0: #{tpu_custom_call.1}
  #allocation0 [shape = 'u32[]', space=smem, size = 0x4, offset = 0x4, fixed_abs, tag = 'smem constant byte address 0x4 - core index']
  #allocation1 [shape = 'u32[72,128]{1,0:T(1,128)}', space=vmem, size = 0x9000, scoped, tag = 'internal scratch']
  #allocation2 [shape = 'f32[1,1]{1,0:T(1,128)S(1)}', space=vmem, size = 0x200, scoped, tag = 'scoped memory for tpu_custom_call.1']
  %s0 = inlined_call_operand.hbm [shape: f32[8,9], index: 0, kind: input, shape index: {}]
  %s1 = inlined_call_operand.hbm [shape: f32[9,9], index: 1, kind: input, shape index: {}]
  %s2 = inlined_call_operand.vmem [shape: f32[1,9], index: 2, kind: input, shape index: {}]
  %s3 = inlined_call_operand.vmem [shape: f32[1,9], index: 3, kind: input, shape index: {}]
  %s4 = inlined_call_operand.<no memory space> [shape: f32[1,1], index: 4, kind: input, shape index: {}]
  %s5 = inlined_call_operand.vmem [shape: f32[8,1], index: 5, kind: output, shape index: {}]
  %s6 = sld [smem:[#allocation0]]
  $region38: #{tpu_custom_call.1} parent=0
    _
  %s8 = ssub.s32 1, %s6
  %s9 = scalar_select 0, %s8, %s6
  %v10 = vstv %s4
  %11 = vst [vmem:[#allocation2] sm:$0x1] %v10
  $region1: #{tpu_custom_call.1} parent=0
    #allocation3 [shape = 'u8[4096]{0}', space=vmem, size = 0x1000, scoped, tag = 'input window, operand 0, single buffered']
    #allocation4 [shape = 's32[1]{0}', space=sflag, size = 0x4, scoped, tag = 'scoped memory for tpu_custom_call.1']
    #allocation5 [shape = 'u8[8192]{0}', space=vmem, size = 0x2000, scoped, tag = 'input window, operand 1, single buffered']
    #allocation6 [shape = 's32[1]{0}', space=sflag, size = 0x4, scoped, tag = 'scoped memory for tpu_custom_call.1']
    %12 = vsyncpa [#allocation4], 0
    %13 = vsyncpa [#allocation6], 0
    // Predicated region
    $region2: #{tpu_custom_call.1} parent=1 // pred_check
      _
    $region3: #{tpu_custom_call.1} parent=1 // pred_check_branch
      %15 = sbr.rel (0) target = $region5
    $region4: #{tpu_custom_call.1} parent=1 // pred_region
      %17 = vsyncadd [#allocation4], 0
      %s19 = sshll.u32 %s0, 4
      %s20 = int_to_ptr.hbm [resolvable:$true] %s19
      %s21 = sshll.u32 [#allocation3], 4
      %s22 = int_to_ptr.vmem [resolvable:$true] %s21
      %24 = dma.hbm_to_vmem [thread:$0]  %s20, 128, %s22, [#allocation4]
    $region5: #{tpu_custom_call.1} parent=1 // pred_fallthru
      _
    // Predicated region
    $region6: #{tpu_custom_call.1} parent=1 // pred_check
      _
    $region7: #{tpu_custom_call.1} parent=1 // pred_check_branch
      %26 = sbr.rel (0) target = $region9
    $region8: #{tpu_custom_call.1} parent=1 // pred_region
      %28 = vsyncadd [#allocation6], 0
      %s29 = sshll.u32 %s1, 4
      %s30 = int_to_ptr.hbm [resolvable:$true] %s29
      %s31 = sshll.u32 [#allocation5], 4
      %s32 = int_to_ptr.vmem [resolvable:$true] %s31
      %37 = dma.hbm_to_vmem [thread:$0]  %s30, 256, %s32, [#allocation6], 128, 128, 8
    $region9: #{tpu_custom_call.1} parent=1 // pred_fallthru
      _
    // Predicated region
    $region10: #{tpu_custom_call.1} parent=1 // pred_check
      _
    $region11: #{tpu_custom_call.1} parent=1 // pred_check_branch
      %39 = sbr.rel (0) target = $region13
    $region12: #{tpu_custom_call.1} parent=1 // pred_region
      _
    $region13: #{tpu_custom_call.1} parent=1 // pred_fallthru
      _
    // Predicated region
    $region14: #{tpu_custom_call.1} parent=1 // pred_check
      _
    $region15: #{tpu_custom_call.1} parent=1 // pred_check_branch
      %41 = sbr.rel (0) target = $region17
    $region16: #{tpu_custom_call.1} parent=1 // pred_region
      _
    $region17: #{tpu_custom_call.1} parent=1 // pred_fallthru
      _
    // Predicated region
    $region18: #{tpu_custom_call.1} parent=1 // pred_check
      _
    $region19: #{tpu_custom_call.1} parent=1 // pred_check_branch
      %43 = sbr.rel (0) target = $region21
    $region20: #{tpu_custom_call.1} parent=1 // pred_region
      _
    $region21: #{tpu_custom_call.1} parent=1 // pred_fallthru
      _
    // Predicated region
    $region22: #{tpu_custom_call.1} parent=1 // pred_check
      _
    $region23: #{tpu_custom_call.1} parent=1 // pred_check_branch
      %45 = sbr.rel (0) target = $region25
    $region24: #{tpu_custom_call.1} parent=1 // pred_region
      %47 = dma.done [#allocation4], 128
    $region25: #{tpu_custom_call.1} parent=1 // pred_fallthru
      _
    // Predicated region
    $region26: #{tpu_custom_call.1} parent=1 // pred_check
      _
    $region27: #{tpu_custom_call.1} parent=1 // pred_check_branch
      %49 = sbr.rel (0) target = $region29
    $region28: #{tpu_custom_call.1} parent=1 // pred_region
      %51 = dma.done [#allocation6], 256
    $region29: #{tpu_custom_call.1} parent=1 // pred_fallthru
      _
    %v52 = vld [vmem:[#allocation3] sm:$0xff]
    %v53 = vld [vmem:[#allocation5] sm:$0xff]
    %v54 = vld [vmem:[#allocation5 + $0x8] sm:$0x1]
    %v55 = vld [vmem:[%s2] sm:$0x1]
    %v57 = vperm.slane %v55, 0
    %vm59 = vcmask 72704
    %v61 = vsel %vm59, %v52, 0
    %vm63 = vcmask 1040384
    %v65 = vsel %vm63, %v54, 0
    %67 = vmatpush.msra.mxu0 0.0
    %68 = vmatpush.msra.mxu0 0.0
    %69 = vmatpush.msra.mxu0 0.0
    %70 = vmatpush.msra.mxu0 0.0
    %71 = vmatpush.msra.mxu0 0.0
    %72 = vmatpush.msra.mxu0 0.0
    %73 = vmatpush.msra.mxu0 0.0
    %74 = vmatpush.msra.mxu0 0.0
    %75 = vmatpush.msra.mxu0 0.0
    %76 = vmatpush.msra.mxu0 0.0
    %77 = vmatpush.msra.mxu0 0.0
    %78 = vmatpush.msra.mxu0 0.0
    %79 = vmatpush.msra.mxu0 0.0
    %80 = vmatpush.msra.mxu0 0.0
    %81 = vmatpush.msra.mxu0 %v65
    %82 = vmatpush.msra.mxu0 %v53
    %83 = vmatmul.f32.gmra.mxu0 %v61
    %v84 = vpop.f32.mrf.mxu0
    %v85 = vadd.f32 %v57, %v84
    %86 = vdwg.mxu0
    %v87 = vmax.f32 %v85, 0.0
    %v88 = vld [vmem:[%s3] sm:$0x1]
    %v90 = vperm.slane %v88, 0
    %v92 = vmul.f32 %v87, %v90
    %v93 = vsel %vm59, %v92, 0.0
    %94 = vadd.xlane.f32.xlu0 %v93
    %v95 = vpop.xlane.xlu0 %94
    %v96 = vld [vmem:[#allocation2] sm:$0x1]
    %v98 = vperm.slane %v96, 0
    %v100 = vadd.f32 %v95, %v98
    %vm101 = vcmask 7168
    %102 = vst.msk [vmem:[%s5] sm:$0xff] %vm101, %v100
    // Predicated region
    $region30: #{tpu_custom_call.1} parent=1 // pred_check
      _
    $region31: #{tpu_custom_call.1} parent=1 // pred_check_branch
      %104 = sbr.rel (0) target = $region33
    $region32: #{tpu_custom_call.1} parent=1 // pred_region
      _
    $region33: #{tpu_custom_call.1} parent=1 // pred_fallthru
      _
    // Predicated region
    $region34: #{tpu_custom_call.1} parent=1 // pred_check
      _
    $region35: #{tpu_custom_call.1} parent=1 // pred_check_branch
      %106 = sbr.rel (0) target = $region37
    $region36: #{tpu_custom_call.1} parent=1 // pred_region
      _
    $region37: #{tpu_custom_call.1} parent=1 // pred_fallthru
      _
    %107 = vsyncpa [#allocation4], 1
    %108 = vsyncpa [#allocation6], 1

</llo_original>
